<compile_context>
chip_gen: v7x
topology: tpu7x:2x2x1
jax: 0.10.0
libtpu: 0.0.40
codegen_flags: <defaults>
</compile_context>

<pallas_src>
import functools

import jax
import jax.numpy as jnp
from jax.experimental import pallas as pl
from jax.experimental.pallas import tpu as pltpu

ALPHA = 1.0
GAMMA = 2.0
LANE = 128

SINGLE_BLOCK_MAX_BYTES = 512 << 10   # gridless fast path only below this
TARGET_BLOCK_BYTES = 2 << 20         # ~2 MiB per input block in the tiled path


def _bce_with_logits(x, t):
    # Numerically-stable BCE with logits (matches torch.nn.BCEWithLogitsLoss):
    #   max(x, 0) - x*t + log(1 + exp(-|x|))
    return jnp.maximum(x, 0.0) - x * t + jnp.log1p(jnp.exp(-jnp.abs(x)))


def _focal_from_mean_bce(mean_bce, alpha, gamma):
    pt = jnp.exp(-mean_bce)
    base = 1.0 - pt
    g = float(gamma)
    if g.is_integer() and 0.0 <= g <= 8.0:
        # Integer power as a multiply chain (plain VPU ops, no EUP pow).
        n = int(g)
        if n == 0:
            mod = jnp.float32(1.0)
        else:
            mod = base
            for _ in range(n - 1):
                mod = mod * base
    else:
        mod = base ** g
    return (alpha * mod * mean_bce).astype(jnp.float32)


# ----------------------------------------------------------------------------
# Fast path: whole problem in one VMEM block, single kernel invocation.
# ----------------------------------------------------------------------------
def _single_block_kernel(x_ref, t_ref, o_ref, *, inv_n, alpha, gamma):
    x = x_ref[...].astype(jnp.float32)
    t = t_ref[...].astype(jnp.float32)
    mean_bce = jnp.sum(_bce_with_logits(x, t)) * inv_n
    loss = _focal_from_mean_bce(mean_bce, alpha, gamma)
    # Lane-dense (1,128) store; wrapper slices [0,0].
    o_ref[...] = jnp.broadcast_to(loss, o_ref.shape).astype(o_ref.dtype)


# ----------------------------------------------------------------------------
# General path: (slab, step) grid, (8,128) vreg accumulator, tail masked
# in-kernel, per-slab partial sums finished in the wrapper.
# ----------------------------------------------------------------------------
def _tiled_kernel(x_ref, t_ref, o_ref, acc_ref, *, rows, tile_rows,
                  steps_per_slab, needs_mask):
    s = pl.program_id(0)
    i = pl.program_id(1)

    @pl.when(i == 0)
    def _():
        acc_ref[...] = jnp.zeros_like(acc_ref)

    x = x_ref[...].astype(jnp.float32)
    t = t_ref[...].astype(jnp.float32)
    bce = _bce_with_logits(x, t)

    if needs_mask:
        # Zero out rows past the logical end (tail of the last real block and
        # any fully-out-of-range duplicate block from uneven slab splitting).
        g = s * steps_per_slab + i
        valid = rows - g * tile_rows
        row_ids = jax.lax.broadcasted_iota(jnp.int32, bce.shape, 0)
        bce = jnp.where(row_ids < valid, bce, 0.0)

    # Pure-VPU partial reduce into an (8,128) vreg accumulator (no XLU here).
    acc_ref[...] += jnp.sum(bce.reshape(tile_rows // 8, 8, LANE), axis=0)

    @pl.when(i == steps_per_slab - 1)
    def _():
        o_ref[...] = acc_ref[...]


def focal_loss(inputs, targets, alpha=ALPHA, gamma=GAMMA):
    """inputs/targets: same-shape float arrays (e.g. NCHW). Returns scalar f32."""
    assert inputs.shape == targets.shape
    total = inputs.size
    assert total % LANE == 0, "total element count must be a multiple of 128"
    rows = total // LANE
    inv_n = 1.0 / float(total)

    # Keep the original dtype through the wrapper (no HBM copies); the kernel
    # casts to f32 in-register.
    x2d = inputs.reshape(rows, LANE)
    t2d = targets.reshape(rows, LANE)

    itemsize = jnp.dtype(x2d.dtype).itemsize
    min_sub = {4: 8, 2: 16, 1: 32}.get(itemsize, 8)

    # ---- Fast path: one block, no grid, no accumulator. ----
    if rows * LANE * itemsize <= SINGLE_BLOCK_MAX_BYTES:
        kernel = functools.partial(
            _single_block_kernel, inv_n=inv_n, alpha=alpha, gamma=gamma)
        out = pl.pallas_call(
            kernel,
            out_shape=jax.ShapeDtypeStruct((1, LANE), jnp.float32),
            in_specs=[
                pl.BlockSpec((rows, LANE), lambda: (0, 0)),
                pl.BlockSpec((rows, LANE), lambda: (0, 0)),
            ],
            out_specs=pl.BlockSpec((1, LANE), lambda: (0, 0)),
        )(x2d, t2d)
        return out[0, 0]

    # ---- General path: large streaming tiles, no HBM padding copies. ----
    tile_rows = min(rows, TARGET_BLOCK_BYTES // (LANE * itemsize))
    tile_rows = max(min_sub, (tile_rows // min_sub) * min_sub)
    total_steps = pl.cdiv(rows, tile_rows)

    # Two slabs -> both TensorCores on v7x; harmless sequential outer loop on
    # single-TC chips. Only worth it with enough inner steps per slab.
    num_slabs = 2 if total_steps >= 4 else 1
    steps_per_slab = pl.cdiv(total_steps, num_slabs)
    needs_mask = (num_slabs * steps_per_slab * tile_rows != rows)

    if num_slabs * steps_per_slab == total_steps:
        def in_map(s, i):
            return (s * steps_per_slab + i, 0)
    else:
        # Uneven slab split: clamp duplicate trailing blocks onto the last real
        # block; their contribution is fully masked to zero in the kernel.
        def in_map(s, i):
            return (jnp.minimum(s * steps_per_slab + i, total_steps - 1), 0)

    kernel = functools.partial(
        _tiled_kernel, rows=rows, tile_rows=tile_rows,
        steps_per_slab=steps_per_slab, needs_mask=needs_mask)

    partials = pl.pallas_call(
        kernel,
        out_shape=jax.ShapeDtypeStruct((num_slabs * 8, LANE), jnp.float32),
        grid_spec=pltpu.PrefetchScalarGridSpec(
            num_scalar_prefetch=0,
            grid=(num_slabs, steps_per_slab),
            in_specs=[
                pl.BlockSpec((tile_rows, LANE), in_map),
                pl.BlockSpec((tile_rows, LANE), in_map),
            ],
            out_specs=pl.BlockSpec((8, LANE), lambda s, i: (s, 0)),
            scratch_shapes=[pltpu.VMEM((8, LANE), jnp.float32)],
        ),
        compiler_params=pltpu.CompilerParams(
            dimension_semantics=("parallel", "arbitrary")),
    )(x2d, t2d)

    # Tiny epilogue on a (num_slabs*8, 128) slab: final reduce + focal.
    mean_bce = jnp.sum(partials) * inv_n
    return _focal_from_mean_bce(mean_bce, alpha, gamma)


def focal_loss_ref(inputs, targets, alpha=ALPHA, gamma=GAMMA):
    x = inputs.astype(jnp.float32)
    t = targets.astype(jnp.float32)
    bce = jnp.mean(jnp.maximum(x, 0.0) - x * t + jnp.log1p(jnp.exp(-jnp.abs(x))))
    pt = jnp.exp(-bce)
    return alpha * (1.0 - pt) ** gamma * bce


if __name__ == "__main__":
    key = jax.random.PRNGKey(0)
    k1, k2, k3, k4 = jax.random.split(key, 4)

    # Spec-sized case (NCHW logits + soft targets): fast single-block path.
    inputs = jax.random.normal(k1, (2, 4, 16, 16), dtype=jnp.float32)
    targets = jax.random.uniform(k2, (2, 4, 16, 16), dtype=jnp.float32)
    loss = jax.block_until_ready(focal_loss(inputs, targets))
    ref = focal_loss_ref(inputs, targets)
    assert jnp.allclose(loss, ref, rtol=1e-5, atol=1e-6), (loss, ref)

    # Larger case: exercises the tiled path (2 parallel slabs, uneven step
    # split, in-kernel tail masking, no HBM padding copies).
    big_in = jax.random.normal(k3, (4, 8, 256, 260), dtype=jnp.float32)
    big_tg = jax.random.uniform(k4, (4, 8, 256, 260), dtype=jnp.float32)
    loss_b = jax.block_until_ready(focal_loss(big_in, big_tg))
    ref_b = focal_loss_ref(big_in, big_tg)
    assert jnp.allclose(loss_b, ref_b, rtol=1e-4, atol=1e-6), (loss_b, ref_b)

    print("KERNEL_OK")
</pallas_src>

<mosaic_0001>
module attributes {stable_mosaic.version = 11 : i64} {
  func.func @_single_block_kernel(%arg0: memref<16x128xf32, #tpu.memory_space<vmem>>, %arg1: memref<16x128xf32, #tpu.memory_space<vmem>>, %arg2: memref<1x128xf32, #tpu.memory_space<vmem>>) attributes {dimension_semantics = [], scalar_prefetch = 0 : i64, scratch_operands = 0 : i64, tpu.core_type = #tpu.core_type<tc>} {
    %c0 = arith.constant 0 : index
    %c0_0 = arith.constant 0 : index
    %0 = vector.load %arg0[%c0, %c0_0] : memref<16x128xf32, #tpu.memory_space<vmem>>, vector<16x128xf32>
    %c0_1 = arith.constant 0 : index
    %c0_2 = arith.constant 0 : index
    %1 = vector.load %arg1[%c0_1, %c0_2] : memref<16x128xf32, #tpu.memory_space<vmem>>, vector<16x128xf32>
    %cst = arith.constant 0.000000e+00 : f32
    %2 = vector.broadcast %cst : f32 to vector<16x128xf32>
    %3 = arith.maximumf %0, %2 : vector<16x128xf32>
    %4 = arith.mulf %0, %1 : vector<16x128xf32>
    %5 = arith.subf %3, %4 : vector<16x128xf32>
    %6 = math.absf %0 : vector<16x128xf32>
    %cst_3 = arith.constant 0.000000e+00 : f32
    %7 = vector.broadcast %cst_3 : f32 to vector<16x128xf32>
    %8 = arith.subf %7, %6 : vector<16x128xf32>
    %9 = math.exp %8 : vector<16x128xf32>
    %10 = math.log1p %9 : vector<16x128xf32>
    %11 = arith.addf %5, %10 : vector<16x128xf32>
    %12 = vector.shape_cast %11 : vector<16x128xf32> to vector<1x16x128xf32>
    %cst_4 = arith.constant dense<0.000000e+00> : vector<1xf32>
    %13 = vector.multi_reduction <add>, %12, %cst_4 [1, 2] : vector<1x16x128xf32> to vector<1xf32>
    %14 = vector.shape_cast %13 : vector<1xf32> to vector<1x1x1xf32>
    %15 = vector.extract %14[0, 0, 0] : f32 from vector<1x1x1xf32>
    %cst_5 = arith.constant 4.8828125E-4 : f32
    %16 = arith.mulf %15, %cst_5 : f32
    %cst_6 = arith.constant 0.000000e+00 : f32
    %17 = arith.subf %cst_6, %16 : f32
    %18 = math.exp %17 : f32
    %cst_7 = arith.constant 1.000000e+00 : f32
    %19 = arith.subf %cst_7, %18 : f32
    %20 = arith.mulf %19, %19 : f32
    %cst_8 = arith.constant 1.000000e+00 : f32
    %21 = arith.mulf %cst_8, %20 : f32
    %22 = arith.mulf %21, %16 : f32
    %23 = vector.broadcast %22 : f32 to vector<1x128xf32>
    %c0_9 = arith.constant 0 : index
    %c0_10 = arith.constant 0 : index
    %24 = vector.load %arg2[%c0_9, %c0_10] : memref<1x128xf32, #tpu.memory_space<vmem>>, vector<1x128xf32>
    tpu.vector_store %arg2[%c0_9, %c0_10], %23 {strides = array<i32>} : memref<1x128xf32, #tpu.memory_space<vmem>>, vector<1x128xf32>,
    return
  }
}

</mosaic_0001>

<llo_original>
// kernel: tpu_custom_call.1
$region0: #{tpu_custom_call.1}
  #allocation0 [shape = 'u32[]', space=smem, size = 0x4, offset = 0x4, fixed_abs, tag = 'smem constant byte address 0x4 - core index']
  #allocation1 [shape = 'u32[144,128]{1,0:T(1,128)}', space=vmem, size = 0x12000, scoped, tag = 'internal scratch']
  %s0 = inlined_call_operand.hbm [shape: f32[16,128], index: 0, kind: input, shape index: {}]
  %s1 = inlined_call_operand.hbm [shape: f32[16,128], index: 1, kind: input, shape index: {}]
  %s2 = inlined_call_operand.hbm [shape: f32[1,128], index: 2, kind: output, shape index: {}]
  %s3 = sld [smem:[#allocation0]]
  $region26: #{tpu_custom_call.1} parent=0
    _
  %s5 = ssub.s32 1, %s3
  %s6 = scalar_select 0, %s5, %s3
  $region1: #{tpu_custom_call.1} parent=0
    #allocation2 [shape = 'u8[8192]{0}', space=vmem, size = 0x2000, scoped, tag = 'input window, operand 0, single buffered']
    #allocation3 [shape = 's32[1]{0}', space=sflag, size = 0x4, scoped, tag = 'scoped memory for tpu_custom_call.1']
    #allocation4 [shape = 's32[1]{0}', space=sflag, size = 0x4, scoped, tag = 'scoped memory for tpu_custom_call.1']
    #allocation5 [shape = 'u8[8192]{0}', space=vmem, size = 0x2000, scoped, tag = 'input window, operand 1, single buffered']
    #allocation6 [shape = 's32[1]{0}', space=sflag, size = 0x4, scoped, tag = 'scoped memory for tpu_custom_call.1']
    #allocation7 [shape = 'u8[512]{0}', space=vmem, size = 0x400, scoped, tag = 'output window, operand 0, single buffered']
    %7 = vsyncpa [#allocation3], 0
    %8 = vsyncpa [#allocation6], 0
    %9 = vsyncpa [#allocation4], 0
    // Predicated region
    $region2: #{tpu_custom_call.1} parent=1 // pred_check
      _
    $region3: #{tpu_custom_call.1} parent=1 // pred_check_branch
      %11 = sbr.rel (0) target = $region5
    $region4: #{tpu_custom_call.1} parent=1 // pred_region
      %s13 = ssub.s32 256, 256
      %14 = vsyncadd [#allocation3], %s13
      %s15 = sshll.u32 [#allocation2], 4
      %s16 = int_to_ptr.vmem [resolvable:$true] %s15
      %21 = dma.hbm_to_vmem [thread:$0]  %s0, 256, %s16, [#allocation3], 128, 128, 8
    $region5: #{tpu_custom_call.1} parent=1 // pred_fallthru
      _
    // Predicated region
    $region6: #{tpu_custom_call.1} parent=1 // pred_check
      _
    $region7: #{tpu_custom_call.1} parent=1 // pred_check_branch
      %23 = sbr.rel (0) target = $region9
    $region8: #{tpu_custom_call.1} parent=1 // pred_region
      %s25 = ssub.s32 256, 256
      %26 = vsyncadd [#allocation6], %s25
      %s27 = sshll.u32 [#allocation5], 4
      %s28 = int_to_ptr.vmem [resolvable:$true] %s27
      %33 = dma.hbm_to_vmem [thread:$0]  %s1, 256, %s28, [#allocation6], 128, 128, 8
    $region9: #{tpu_custom_call.1} parent=1 // pred_fallthru
      _
    // Predicated region
    $region10: #{tpu_custom_call.1} parent=1 // pred_check
      _
    $region11: #{tpu_custom_call.1} parent=1 // pred_check_branch
      %35 = sbr.rel (0) target = $region13
    $region12: #{tpu_custom_call.1} parent=1 // pred_region
      %36 = dma.done [#allocation3], 256
    $region13: #{tpu_custom_call.1} parent=1 // pred_fallthru
      _
    // Predicated region
    $region14: #{tpu_custom_call.1} parent=1 // pred_check
      _
    $region15: #{tpu_custom_call.1} parent=1 // pred_check_branch
      %38 = sbr.rel (0) target = $region17
    $region16: #{tpu_custom_call.1} parent=1 // pred_region
      %39 = dma.done [#allocation6], 256
    $region17: #{tpu_custom_call.1} parent=1 // pred_fallthru
      _
    %v40 = vld [vmem:[#allocation2] sm:$0xff]
    %v41 = vld [vmem:[#allocation2 + $0x8] sm:$0xff]
    %v42 = vld [vmem:[#allocation5] sm:$0xff]
    %v43 = vld [vmem:[#allocation5 + $0x8] sm:$0xff]
    %v44 = vmax.f32 %v40, 0.0
    %v45 = vmax.f32 %v41, 0.0
    %v46 = vmul.f32 %v40, %v42
    %v47 = vmul.f32 %v41, %v43
    %v48 = vsub.f32 %v44, %v46
    %v49 = vsub.f32 %v45, %v47
    %v50 = vand.u32 2147483647, %v40
    %v51 = vand.u32 2147483647, %v41
    %v52 = vsub.f32 0.0, %v50
    %v53 = vsub.f32 0.0, %v51
    %v54 = vmul.f32 %v52, 1.442695
    %v55 = vpow.pop %v54
    %v56 = vmul.f32 %v53, 1.442695
    %v57 = vpow.pop %v56
    %v58 = vadd.f32 %v55, 1.0
    %v59 = vlog2.pop %v58
    %v60 = vmul.f32 %v59, 0.6931472
    %v61 = vmul.f32 -0.5, %v55
    %v62 = vadd.f32 %v61, 1.0
    %v63 = vmul.f32 %v62, %v55
    %v64 = vand.u32 2147483647, %v55
    %vm65 = vcmp.lt.f32.partialorder %v64, 0.0004427343
    %v66 = vsel %vm65, %v63, %v60
    %v67 = vadd.f32 %v57, 1.0
    %v68 = vlog2.pop %v67
    %v69 = vmul.f32 %v68, 0.6931472
    %v70 = vmul.f32 -0.5, %v57
    %v71 = vadd.f32 %v70, 1.0
    %v72 = vmul.f32 %v71, %v57
    %v73 = vand.u32 2147483647, %v57
    %vm74 = vcmp.lt.f32.partialorder %v73, 0.0004427343
    %v75 = vsel %vm74, %v72, %v69
    %v76 = vadd.f32 %v48, %v66
    %v77 = vadd.f32 %v49, %v75
    %v78 = vadd.f32 %v76, %v77
    %79 = vadd.xlane.f32.xlu0 %v78
    %v80 = vpop.xlane.xlu0 %79
    %v81 = vrot.slane %v80, 4
    %v82 = vadd.f32 %v80, %v81
    %v83 = vrot.slane %v82, 2
    %v84 = vadd.f32 %v82, %v83
    %v85 = vrot.slane %v84, 1
    %v86 = vadd.f32 %v84, %v85
    %s87 = vtos %v86
    %s88 = smul.f32 %s87, 0.00048828125
    %s89 = ssub.f32 0.0, %s88
    %v90 = vstv %s89
    %v91 = vmul.f32 %v90, 1.442695
    %v92 = vpow.pop %v91
    %s93 = vtos %v92
    %s94 = ssub.f32 1.0, %s93
    %s95 = smul.f32 %s94, %s94
    %s96 = smul.f32 %s95, %s88
    %v97 = vstv %s96
    %98 = vst [vmem:[#allocation7] sm:$0x1] %v97
    // Predicated region
    $region18: #{tpu_custom_call.1} parent=1 // pred_check
      _
    $region19: #{tpu_custom_call.1} parent=1 // pred_check_branch
      %100 = sbr.rel (0) target = $region21
    $region20: #{tpu_custom_call.1} parent=1 // pred_region
      %s102 = ssub.s32 16, 16
      %103 = vsyncadd [#allocation4], %s102
      %s105 = sshll.u32 [#allocation7], 4
      %s106 = int_to_ptr.vmem [resolvable:$true] %s105
      %108 = dma.vmem_to_hbm [thread:$0]  %s106, 16, %s2, [#allocation4]
    $region21: #{tpu_custom_call.1} parent=1 // pred_fallthru
      _
    // Predicated region
    $region22: #{tpu_custom_call.1} parent=1 // pred_check
      _
    $region23: #{tpu_custom_call.1} parent=1 // pred_check_branch
      %110 = sbr.rel (0) target = $region25
    $region24: #{tpu_custom_call.1} parent=1 // pred_region
      %111 = dma.done [#allocation4], 16
    $region25: #{tpu_custom_call.1} parent=1 // pred_fallthru
      _
    %112 = vsyncpa [#allocation3], 1
    %113 = vsyncpa [#allocation6], 1
    %114 = vsyncpa [#allocation4], 1

</llo_original>
